<compile_context>
chip_gen: v7x
topology: tpu7x:2x2x1
jax: 0.10.0
libtpu: 0.0.40
codegen_flags: <defaults>
</compile_context>

<pallas_src>
import jax
import jax.numpy as jnp
from jax.experimental import pallas as pl
from jax.experimental.pallas import tpu as pltpu


def _round_up(x, m):
    return ((x + m - 1) // m) * m


def box_decoder_kernel(x_ref, wt_ref, b_ref, o_ref):
    # x_ref : (TM, F)  batch tile of parent_feature
    # wt_ref: (F, Bo)  pre-transposed weight (VMEM-resident across the grid)
    # b_ref : (1, Bo)  bias (VMEM-resident; broadcasts over sublanes)
    # o_ref : (TM, Bo) output tile in natural orientation
    acc = jnp.dot(x_ref[...], wt_ref[...], preferred_element_type=jnp.float32)
    acc = acc + b_ref[...]
    o_ref[...] = jnp.tanh(acc).astype(o_ref.dtype)


def box_decoder(parent_feature, weight, bias, *, tm=2048):
    """parent_feature: (B, F); weight: (box_size, feature_size) (PyTorch nn.Linear
    layout); bias: (box_size,). Returns tanh(parent_feature @ weight.T + bias),
    shape (B, box_size)."""
    B, F = parent_feature.shape
    Bo, F_w = weight.shape
    assert F == F_w, "weight must be (box_size, feature_size)"

    itemsize = jnp.dtype(parent_feature.dtype).itemsize

    # --- Batch tile selection -------------------------------------------------
    # Round user tm up to a multiple of 128 (lane-aligned blocks / stores).
    tm = _round_up(max(int(tm), 128), 128)
    TM = min(tm, _round_up(B, 128))

    # Keep at least 2 grid steps for large B so the "parallel" axis can shard
    # across v7x's two TensorCores (harmless ~0.35 us extra on single-TC chips).
    if B >= 256:
        TM = min(TM, _round_up(pl.cdiv(B, 2), 128))

    # Conservative VMEM budget (fits v7x's 32 MiB scoped default with headroom):
    # double-buffered x tile + double-buffered out tile per batch row.
    VMEM_BUDGET = 16 << 20
    bytes_per_row = 2 * (F + Bo) * itemsize
    tm_cap = max(128, (VMEM_BUDGET // bytes_per_row) // 128 * 128)
    TM = min(TM, tm_cap)

    grid = (pl.cdiv(B, TM),)

    # One-time tiny layout ops (F*Bo and Bo elements).
    wt = weight.T                    # (F, Bo)
    b2d = bias.reshape(1, Bo)        # (1, Bo)

    cost = pl.CostEstimate(
        flops=2 * B * F * Bo,
        transcendentals=B * Bo,
        bytes_accessed=itemsize * (B * F + F * Bo + Bo + B * Bo),
    )

    # TODO(synk): if the surrounding model tolerates bf16 activations, feeding
    # bf16 x (keeping preferred_element_type=f32) halves the dominant HBM read.
    out = pl.pallas_call(
        box_decoder_kernel,
        out_shape=jax.ShapeDtypeStruct((B, Bo), parent_feature.dtype),
        grid_spec=pl.GridSpec(
            grid=grid,
            in_specs=[
                pl.BlockSpec((TM, F), lambda i: (i, 0)),   # x: tiled over batch
                pl.BlockSpec((F, Bo), lambda i: (0, 0)),   # weight^T: resident
                pl.BlockSpec((1, Bo), lambda i: (0, 0)),   # bias: resident
            ],
            out_specs=pl.BlockSpec((TM, Bo), lambda i: (i, 0)),
        ),
        compiler_params=pltpu.CompilerParams(
            dimension_semantics=("parallel",)),
        cost_estimate=cost,
    )(parent_feature, wt, b2d)

    return out


if __name__ == "__main__":
    feature_size = 32
    box_size = 16
    batch = 8

    key = jax.random.PRNGKey(0)
    k_x, k_w, k_b = jax.random.split(key, 3)

    # Deterministic synthetic parameters (shapes per nn.Linear(feature_size, box_size)).
    parent_feature = jax.random.normal(k_x, (batch, feature_size), dtype=jnp.float32)
    bound = 1.0 / (feature_size ** 0.5)
    weight = jax.random.uniform(k_w, (box_size, feature_size),
                                minval=-bound, maxval=bound, dtype=jnp.float32)
    bias = jax.random.uniform(k_b, (box_size,),
                              minval=-bound, maxval=bound, dtype=jnp.float32)

    out = box_decoder(parent_feature, weight, bias)
    out = jax.block_until_ready(out)

    ref = jnp.tanh(parent_feature @ weight.T + bias)
    assert out.shape == (batch, box_size)
    assert jnp.allclose(out, ref, atol=1e-5, rtol=1e-5)

    # Multi-tile path: grid >= 2 (forced for B >= 256), last tile partial.
    big_batch = 1100
    x_big = jax.random.normal(jax.random.PRNGKey(1), (big_batch, feature_size),
                              dtype=jnp.float32)
    out_big = jax.block_until_ready(box_decoder(x_big, weight, bias))
    ref_big = jnp.tanh(x_big @ weight.T + bias)
    assert out_big.shape == (big_batch, box_size)
    assert jnp.allclose(out_big, ref_big, atol=1e-5, rtol=1e-5)

    # Large-batch path with default TM=2048 (grid = 3, all full-ish tiles).
    huge_batch = 5000
    x_huge = jax.random.normal(jax.random.PRNGKey(2), (huge_batch, feature_size),
                               dtype=jnp.float32)
    out_huge = jax.block_until_ready(box_decoder(x_huge, weight, bias))
    ref_huge = jnp.tanh(x_huge @ weight.T + bias)
    assert out_huge.shape == (huge_batch, box_size)
    assert jnp.allclose(out_huge, ref_huge, atol=1e-5, rtol=1e-5)

    print("KERNEL_OK")
</pallas_src>

<mosaic_0001>
module attributes {stable_mosaic.version = 11 : i64} {
  func.func @box_decoder_kernel(%arg0: i32, %arg1: memref<128x32xf32, #tpu.memory_space<vmem>>, %arg2: memref<32x16xf32, #tpu.memory_space<vmem>>, %arg3: memref<1x16xf32, #tpu.memory_space<vmem>>, %arg4: memref<128x16xf32, #tpu.memory_space<vmem>>) attributes {dimension_semantics = [#tpu.dimension_semantics<parallel>], iteration_bounds = array<i64: 1>, scalar_prefetch = 0 : i64, scratch_operands = 0 : i64, tpu.core_type = #tpu.core_type<tc>, window_params = [{transform_indices = @transform_0, window_bounds = array<i64: 128, 32>}, {pipeline_mode = #tpu.pipeline_mode<synchronous>, transform_indices = @transform_1, window_bounds = array<i64: 32, 16>}, {pipeline_mode = #tpu.pipeline_mode<synchronous>, transform_indices = @transform_2, window_bounds = array<i64: 1, 16>}, {transform_indices = @transform_3, window_bounds = array<i64: 128, 16>}]} {
    %c0 = arith.constant 0 : index
    %c0_0 = arith.constant 0 : index
    %0 = vector.load %arg1[%c0, %c0_0] : memref<128x32xf32, #tpu.memory_space<vmem>>, vector<128x32xf32>
    %c0_1 = arith.constant 0 : index
    %c0_2 = arith.constant 0 : index
    %1 = vector.load %arg2[%c0_1, %c0_2] : memref<32x16xf32, #tpu.memory_space<vmem>>, vector<32x16xf32>
    %cst = arith.constant dense<0.000000e+00> : vector<128x16xf32>
    %2 = tpu.matmul %0, %1, %cst {dimension_numbers = #tpu.dot_dimension_numbers<[1], [0], [0], [1], [0, 0, 1, 1], [], []>} : vector<128x32xf32>, vector<32x16xf32>, vector<128x16xf32> -> vector<128x16xf32>
    %c0_3 = arith.constant 0 : index
    %c0_4 = arith.constant 0 : index
    %3 = vector.load %arg3[%c0_3, %c0_4] : memref<1x16xf32, #tpu.memory_space<vmem>>, vector<1x16xf32>
    %4 = vector.broadcast %3 : vector<1x16xf32> to vector<128x16xf32>
    %5 = arith.addf %2, %4 : vector<128x16xf32>
    %6 = math.tanh %5 : vector<128x16xf32>
    %c0_5 = arith.constant 0 : index
    %c0_6 = arith.constant 0 : index
    %7 = vector.load %arg4[%c0_5, %c0_6] : memref<128x16xf32, #tpu.memory_space<vmem>>, vector<128x16xf32>
    tpu.vector_store %arg4[%c0_5, %c0_6], %6 {strides = array<i32>} : memref<128x16xf32, #tpu.memory_space<vmem>>, vector<128x16xf32>,
    return
  }
  func.func @transform_0(%arg0: i32) -> (i32, i32) {
    %c0_i32 = arith.constant 0 : i32
    %c0_i32_0 = arith.constant 0 : i32
    return %arg0, %c0_i32 : i32, i32
  }
  func.func @transform_1(%arg0: i32) -> (i32, i32) {
    %c0_i32 = arith.constant 0 : i32
    %c0_i32_0 = arith.constant 0 : i32
    %c0_i32_1 = arith.constant 0 : i32
    return %c0_i32, %c0_i32_0 : i32, i32
  }
  func.func @transform_2(%arg0: i32) -> (i32, i32) {
    %c0_i32 = arith.constant 0 : i32
    %c0_i32_0 = arith.constant 0 : i32
    %c0_i32_1 = arith.constant 0 : i32
    return %c0_i32, %c0_i32_0 : i32, i32
  }
  func.func @transform_3(%arg0: i32) -> (i32, i32) {
    %c0_i32 = arith.constant 0 : i32
    %c0_i32_0 = arith.constant 0 : i32
    return %arg0, %c0_i32 : i32, i32
  }
}

</mosaic_0001>

<llo_original>
// kernel: tpu_custom_call.1
$region0: #{tpu_custom_call.1}
  #allocation0 [shape = 'u32[]', space=smem, size = 0x4, offset = 0x4, fixed_abs, tag = 'smem constant byte address 0x4 - core index']
  #allocation1 [shape = 'u32[144,128]{1,0:T(1,128)}', space=vmem, size = 0x12000, scoped, tag = 'internal scratch']
  %s0 = inlined_call_operand.vmem [shape: f32[8,32], index: 0, kind: input, shape index: {}]
  %s1 = inlined_call_operand.vmem [shape: f32[32,16], index: 1, kind: input, shape index: {}]
  %s2 = inlined_call_operand.vmem [shape: f32[1,16], index: 2, kind: input, shape index: {}]
  %s3 = inlined_call_operand.hbm [shape: f32[8,16], index: 3, kind: output, shape index: {}]
  %s4 = sld [smem:[#allocation0]]
  $region22: #{tpu_custom_call.1} parent=0
    _
  %s6 = ssub.s32 1, %s4
  %s7 = scalar_select 0, %s6, %s4
  $region1: #{tpu_custom_call.1} parent=0
    #allocation2 [shape = 'u8[65536]{0}', space=vmem, size = 0x10000, scoped, tag = 'output window, operand 0, single buffered']
    #allocation3 [shape = 's32[1]{0}', space=sflag, size = 0x4, scoped, tag = 'scoped memory for tpu_custom_call.1']
    %8 = vsyncpa [#allocation3], 0
    // Predicated region
    $region2: #{tpu_custom_call.1} parent=1 // pred_check
      _
    $region3: #{tpu_custom_call.1} parent=1 // pred_check_branch
      %10 = sbr.rel (0) target = $region5
    $region4: #{tpu_custom_call.1} parent=1 // pred_region
      _
    $region5: #{tpu_custom_call.1} parent=1 // pred_fallthru
      _
    // Predicated region
    $region6: #{tpu_custom_call.1} parent=1 // pred_check
      _
    $region7: #{tpu_custom_call.1} parent=1 // pred_check_branch
      %12 = sbr.rel (0) target = $region9
    $region8: #{tpu_custom_call.1} parent=1 // pred_region
      _
    $region9: #{tpu_custom_call.1} parent=1 // pred_fallthru
      _
    // Predicated region
    $region10: #{tpu_custom_call.1} parent=1 // pred_check
      _
    $region11: #{tpu_custom_call.1} parent=1 // pred_check_branch
      %14 = sbr.rel (0) target = $region13
    $region12: #{tpu_custom_call.1} parent=1 // pred_region
      _
    $region13: #{tpu_custom_call.1} parent=1 // pred_fallthru
      _
    %v15 = vld [vmem:[%s0] sm:$0xff]
    %v16 = vld [vmem:[%s0 + $0x8] sm:$0xff]
    %v17 = vld [vmem:[%s0 + $0x10] sm:$0xff]
    %v18 = vld [vmem:[%s0 + $0x18] sm:$0xff]
    %v19 = vld [vmem:[%s0 + $0x20] sm:$0xff]
    %v20 = vld [vmem:[%s0 + $0x28] sm:$0xff]
    %v21 = vld [vmem:[%s0 + $0x30] sm:$0xff]
    %v22 = vld [vmem:[%s0 + $0x38] sm:$0xff]
    %v23 = vld [vmem:[%s0 + $0x40] sm:$0xff]
    %v24 = vld [vmem:[%s0 + $0x48] sm:$0xff]
    %v25 = vld [vmem:[%s0 + $0x50] sm:$0xff]
    %v26 = vld [vmem:[%s0 + $0x58] sm:$0xff]
    %v27 = vld [vmem:[%s0 + $0x60] sm:$0xff]
    %v28 = vld [vmem:[%s0 + $0x68] sm:$0xff]
    %v29 = vld [vmem:[%s0 + $0x70] sm:$0xff]
    %v30 = vld [vmem:[%s0 + $0x78] sm:$0xff]
    %v31 = vld [vmem:[%s1] sm:$0xff]
    %v32 = vld [vmem:[%s1 + $0x8] sm:$0xff]
    %v33 = vld [vmem:[%s1 + $0x10] sm:$0xff]
    %v34 = vld [vmem:[%s1 + $0x18] sm:$0xff]
    %v35 = vld [vmem:[%s2] sm:$0x1]
    %v37 = vlaneseq
    %v38 = vshrl.u32 %v37, 7
    %v39 = vsub.s32 0, %v38
    %v40 = vrot.slane %v35, %v39
    %vm42 = vcmask 261120
    %v44 = vsel %vm42, %v15, 0
    %v47 = vsel %vm42, %v16, 0
    %v50 = vsel %vm42, %v17, 0
    %v53 = vsel %vm42, %v18, 0
    %v56 = vsel %vm42, %v19, 0
    %v59 = vsel %vm42, %v20, 0
    %v62 = vsel %vm42, %v21, 0
    %v65 = vsel %vm42, %v22, 0
    %v68 = vsel %vm42, %v23, 0
    %v71 = vsel %vm42, %v24, 0
    %v74 = vsel %vm42, %v25, 0
    %v77 = vsel %vm42, %v26, 0
    %v80 = vsel %vm42, %v27, 0
    %v83 = vsel %vm42, %v28, 0
    %v86 = vsel %vm42, %v29, 0
    %v89 = vsel %vm42, %v30, 0
    %91 = vmatprep.subr.mxu0 0.0
    %92 = vmatpush1.msra.mxu0 %v31
    %93 = vmatprep.subr.mxu0 0.0
    %94 = vmatpush1.msra.mxu0 %v32
    %95 = vmatprep.subr.mxu0 0.0
    %96 = vmatpush1.msra.mxu0 %v33
    %97 = vmatprep.subr.mxu0 0.0
    %98 = vmatpush1.msra.mxu0 %v34
    %99 = vmatprep.subr.mxu0 0.0
    %100 = vmatpush1.msra.mxu0 0.0
    %101 = vmatprep.subr.mxu0 0.0
    %102 = vmatpush1.msra.mxu0 0.0
    %103 = vmatprep.subr.mxu0 0.0
    %104 = vmatpush1.msra.mxu0 0.0
    %105 = vmatprep.subr.mxu0 0.0
    %106 = vmatpush1.msra.mxu0 0.0
    %107 = vmatprep.subr.mxu0 0.0
    %108 = vmatpush1.msra.mxu0 0.0
    %109 = vmatprep.subr.mxu0 0.0
    %110 = vmatpush1.msra.mxu0 0.0
    %111 = vmatprep.subr.mxu0 0.0
    %112 = vmatpush1.msra.mxu0 0.0
    %113 = vmatprep.subr.mxu0 0.0
    %114 = vmatpush1.msra.mxu0 0.0
    %115 = vmatprep.subr.mxu0 0.0
    %116 = vmatpush1.msra.mxu0 0.0
    %117 = vmatprep.subr.mxu0 0.0
    %118 = vmatpush1.msra.mxu0 0.0
    %119 = vmatprep.subr.mxu0 0.0
    %120 = vmatpush1.msra.mxu0 0.0
    %121 = vmatprep.subr.mxu0 0.0
    %122 = vmatpush1.msra.mxu0 0.0
    %123 = vmatprep.subr.mxu0 0.0
    %124 = vmatpush1.msra.mxu0 0.0
    %125 = vmatprep.subr.mxu0 0.0
    %126 = vmatpush1.msra.mxu0 0.0
    %127 = vmatprep.subr.mxu0 0.0
    %128 = vmatpush1.msra.mxu0 0.0
    %129 = vmatprep.subr.mxu0 0.0
    %130 = vmatpush1.msra.mxu0 0.0
    %131 = vmatprep.subr.mxu0 0.0
    %132 = vmatpush1.msra.mxu0 0.0
    %133 = vmatprep.subr.mxu0 0.0
    %134 = vmatpush1.msra.mxu0 0.0
    %135 = vmatprep.subr.mxu0 0.0
    %136 = vmatpush1.msra.mxu0 0.0
    %137 = vmatprep.subr.mxu0 0.0
    %138 = vmatpush1.msra.mxu0 0.0
    %139 = vmatprep.subr.mxu0 0.0
    %140 = vmatpush1.msra.mxu0 0.0
    %141 = vmatprep.subr.mxu0 0.0
    %142 = vmatpush1.msra.mxu0 0.0
    %143 = vmatprep.subr.mxu0 0.0
    %144 = vmatpush1.msra.mxu0 0.0
    %145 = vmatprep.subr.mxu0 0.0
    %146 = vmatpush1.msra.mxu0 0.0
    %147 = vmatprep.subr.mxu0 0.0
    %148 = vmatpush1.msra.mxu0 0.0
    %149 = vmatprep.subr.mxu0 0.0
    %150 = vmatpush1.msra.mxu0 0.0
    %151 = vmatprep.subr.mxu0 0.0
    %152 = vmatpush1.msra.mxu0 0.0
    %153 = vmatprep.subr.mxu0 0.0
    %154 = vmatpush1.msra.mxu0 0.0
    %155 = vmatprep.mubr.f32.mxu0 0.0
    %156 = vmatmul.mubr.f32.gmra.mrb[0].mxu0 %v44
    %v157 = vpop.f32.mrb[0].mxu0
    %v158 = vadd.f32 %v40, %v157
    %v159 = vpop.f32.mrb[0].mxu0
    %160 = vmatprep.mubr.f32.mxu0 0.0
    %161 = vmatmul.mubr.f32.gmra.mrb[0].mxu0 %v47
    %v162 = vpop.f32.mrb[0].mxu0
    %v163 = vadd.f32 %v40, %v162
    %v164 = vpop.f32.mrb[0].mxu0
    %165 = vmatprep.mubr.f32.mxu0 0.0
    %166 = vmatmul.mubr.f32.gmra.mrb[0].mxu0 %v50
    %v167 = vpop.f32.mrb[0].mxu0
    %v168 = vadd.f32 %v40, %v167
    %v169 = vpop.f32.mrb[0].mxu0
    %170 = vmatprep.mubr.f32.mxu0 0.0
    %171 = vmatmul.mubr.f32.gmra.mrb[0].mxu0 %v53
    %v172 = vpop.f32.mrb[0].mxu0
    %v173 = vadd.f32 %v40, %v172
    %v174 = vpop.f32.mrb[0].mxu0
    %175 = vmatprep.mubr.f32.mxu0 0.0
    %176 = vmatmul.mubr.f32.gmra.mrb[0].mxu0 %v56
    %v177 = vpop.f32.mrb[0].mxu0
    %v178 = vadd.f32 %v40, %v177
    %v179 = vpop.f32.mrb[0].mxu0
    %180 = vmatprep.mubr.f32.mxu0 0.0
    %181 = vmatmul.mubr.f32.gmra.mrb[0].mxu0 %v59
    %v182 = vpop.f32.mrb[0].mxu0
    %v183 = vadd.f32 %v40, %v182
    %v184 = vpop.f32.mrb[0].mxu0
    %185 = vmatprep.mubr.f32.mxu0 0.0
    %186 = vmatmul.mubr.f32.gmra.mrb[0].mxu0 %v62
    %v187 = vpop.f32.mrb[0].mxu0
    %v188 = vadd.f32 %v40, %v187
    %v189 = vpop.f32.mrb[0].mxu0
    %190 = vmatprep.mubr.f32.mxu0 0.0
    %191 = vmatmul.mubr.f32.gmra.mrb[0].mxu0 %v65
    %v192 = vpop.f32.mrb[0].mxu0
    %v193 = vadd.f32 %v40, %v192
    %v194 = vpop.f32.mrb[0].mxu0
    %195 = vmatprep.mubr.f32.mxu0 0.0
    %196 = vmatmul.mubr.f32.gmra.mrb[0].mxu0 %v68
    %v197 = vpop.f32.mrb[0].mxu0
    %v198 = vadd.f32 %v40, %v197
    %v199 = vpop.f32.mrb[0].mxu0
    %200 = vmatprep.mubr.f32.mxu0 0.0
    %201 = vmatmul.mubr.f32.gmra.mrb[0].mxu0 %v71
    %v202 = vpop.f32.mrb[0].mxu0
    %v203 = vadd.f32 %v40, %v202
    %v204 = vpop.f32.mrb[0].mxu0
    %205 = vmatprep.mubr.f32.mxu0 0.0
    %206 = vmatmul.mubr.f32.gmra.mrb[0].mxu0 %v74
    %v207 = vpop.f32.mrb[0].mxu0
    %v208 = vadd.f32 %v40, %v207
    %v209 = vpop.f32.mrb[0].mxu0
    %210 = vmatprep.mubr.f32.mxu0 0.0
    %211 = vmatmul.mubr.f32.gmra.mrb[0].mxu0 %v77
    %v212 = vpop.f32.mrb[0].mxu0
    %v213 = vadd.f32 %v40, %v212
    %v214 = vpop.f32.mrb[0].mxu0
    %215 = vmatprep.mubr.f32.mxu0 0.0
    %216 = vmatmul.mubr.f32.gmra.mrb[0].mxu0 %v80
    %v217 = vpop.f32.mrb[0].mxu0
    %v218 = vadd.f32 %v40, %v217
    %v219 = vpop.f32.mrb[0].mxu0
    %220 = vmatprep.mubr.f32.mxu0 0.0
    %221 = vmatmul.mubr.f32.gmra.mrb[0].mxu0 %v83
    %v222 = vpop.f32.mrb[0].mxu0
    %v223 = vadd.f32 %v40, %v222
    %v224 = vpop.f32.mrb[0].mxu0
    %225 = vmatprep.mubr.f32.mxu0 0.0
    %226 = vmatmul.mubr.f32.gmra.mrb[0].mxu0 %v86
    %v227 = vpop.f32.mrb[0].mxu0
    %v228 = vadd.f32 %v40, %v227
    %v229 = vpop.f32.mrb[0].mxu0
    %230 = vmatprep.mubr.f32.mxu0 0.0
    %231 = vmatmul.mubr.f32.gmra.mrb[0].mxu0 %v89
    %v232 = vpop.f32.mrb[0].mxu0
    %v233 = vadd.f32 %v40, %v232
    %v234 = vpop.f32.mrb[0].mxu0
    %235 = vdwg.mxu0
    %v236 = vtanh.pop %v158
    %v237 = vtanh.pop %v163
    %v238 = vtanh.pop %v168
    %v239 = vtanh.pop %v173
    %v240 = vtanh.pop %v178
    %v241 = vtanh.pop %v183
    %v242 = vtanh.pop %v188
    %v243 = vtanh.pop %v193
    %v244 = vtanh.pop %v198
    %v245 = vtanh.pop %v203
    %v246 = vtanh.pop %v208
    %v247 = vtanh.pop %v213
    %v248 = vtanh.pop %v218
    %v249 = vtanh.pop %v223
    %v250 = vtanh.pop %v228
    %v251 = vtanh.pop %v233
    %vm252 = vcmask 130048
    %253 = vst.msk [vmem:[#allocation2] sm:$0xff] %vm252, %v236
    %254 = vst.msk [vmem:[#allocation2 + $0x8] sm:$0xff] %vm252, %v237
    %255 = vst.msk [vmem:[#allocation2 + $0x10] sm:$0xff] %vm252, %v238
    %256 = vst.msk [vmem:[#allocation2 + $0x18] sm:$0xff] %vm252, %v239
    %257 = vst.msk [vmem:[#allocation2 + $0x20] sm:$0xff] %vm252, %v240
    %258 = vst.msk [vmem:[#allocation2 + $0x28] sm:$0xff] %vm252, %v241
    %259 = vst.msk [vmem:[#allocation2 + $0x30] sm:$0xff] %vm252, %v242
    %260 = vst.msk [vmem:[#allocation2 + $0x38] sm:$0xff] %vm252, %v243
    %261 = vst.msk [vmem:[#allocation2 + $0x40] sm:$0xff] %vm252, %v244
    %262 = vst.msk [vmem:[#allocation2 + $0x48] sm:$0xff] %vm252, %v245
    %263 = vst.msk [vmem:[#allocation2 + $0x50] sm:$0xff] %vm252, %v246
    %264 = vst.msk [vmem:[#allocation2 + $0x58] sm:$0xff] %vm252, %v247
    %265 = vst.msk [vmem:[#allocation2 + $0x60] sm:$0xff] %vm252, %v248
    %266 = vst.msk [vmem:[#allocation2 + $0x68] sm:$0xff] %vm252, %v249
    %267 = vst.msk [vmem:[#allocation2 + $0x70] sm:$0xff] %vm252, %v250
    %268 = vst.msk [vmem:[#allocation2 + $0x78] sm:$0xff] %vm252, %v251
    // Predicated region
    $region14: #{tpu_custom_call.1} parent=1 // pred_check
      _
    $region15: #{tpu_custom_call.1} parent=1 // pred_check_branch
      %270 = sbr.rel (0) target = $region17
    $region16: #{tpu_custom_call.1} parent=1 // pred_region
      %s272 = ssub.s32 2048, 128
      %273 = vsyncadd [#allocation3], %s272
      %s274 = sshll.u32 [#allocation2], 4
      %s275 = int_to_ptr.vmem [resolvable:$true] %s274
      %280 = dma.vmem_to_hbm [thread:$0]  %s275, 128, %s3, [#allocation3], 128, 128, 8
    $region17: #{tpu_custom_call.1} parent=1 // pred_fallthru
      _
    // Predicated region
    $region18: #{tpu_custom_call.1} parent=1 // pred_check
      _
    $region19: #{tpu_custom_call.1} parent=1 // pred_check_branch
      %282 = sbr.rel (0) target = $region21
    $region20: #{tpu_custom_call.1} parent=1 // pred_region
      %283 = dma.done [#allocation3], 2048
    $region21: #{tpu_custom_call.1} parent=1 // pred_fallthru
      _
    %284 = vsyncpa [#allocation3], 1

</llo_original>
